<compile_context>
chip_gen: v7x
topology: tpu7x:2x2x1
jax: 0.10.0
libtpu: 0.0.40
codegen_flags: <defaults>
</compile_context>

<pallas_src>
import jax
import jax.numpy as jnp
from jax.experimental import pallas as pl
from jax.experimental.pallas import tpu as pltpu

HIDDEN = 32            # config.hidden_size (small demo size; prod is 768)
OUT = 256 * 3          # decoder output features = 768
LN_EPS = 1e-12         # BERT layer_norm_eps default


def _cdiv(a, b):
    return (a + b - 1) // b


def _gelu(x):
    # TODO(synk): HF/ViLT "gelu" is the exact erf-based GELU; tanh approximation
    # used here for guaranteed TPU/EUP lowering (~1e-3 relative difference).
    return jax.nn.gelu(x, approximate=True)


def mpp_head_kernel(x_ref, w1_ref, b1_ref, w2_ref, b2_ref, o_ref):
    # x_ref:  (TM, H)     row tile of flattened tokens (compute dtype, e.g. bf16)
    # w1_ref: (H, H)      transform.dense weight (in, out), compute dtype
    # b1_ref: (1, H)      transform.dense bias, f32
    # w2_ref: (H, OUT)    decoder weight with LN gamma folded in, compute dtype
    # b2_ref: (1, OUT)    decoder bias with LN beta folded in, f32
    # o_ref:  (TM, OUT)
    #
    # Matmul operands stay in their native (bf16-friendly) dtype for the fast
    # MXU path; accumulation is f32 via preferred_element_type.
    h = jnp.dot(x_ref[...], w1_ref[...], preferred_element_type=jnp.float32)
    h = h + b1_ref[...]
    h = _gelu(h)

    # transform.LayerNorm over the hidden axis — single-pass statistics
    # (var = E[h^2] - mu^2), computed in f32 after GELU.
    inv_h = jnp.float32(1.0 / h.shape[-1])
    mu = jnp.sum(h, axis=-1, keepdims=True) * inv_h
    ms = jnp.sum(h * h, axis=-1, keepdims=True) * inv_h
    var = jnp.maximum(ms - mu * mu, 0.0)
    hn = (h - mu) * jax.lax.rsqrt(var + LN_EPS)
    # gamma/beta are folded into w2/b2 in the wrapper (exact rewrite), so the
    # normalized activations feed the decoder matmul directly.

    y = jnp.dot(hn.astype(w2_ref.dtype), w2_ref[...],
                preferred_element_type=jnp.float32)
    y = y + b2_ref[...]
    o_ref[...] = y.astype(o_ref.dtype)


def mpp_head(x, params, *, tm=512, compute_dtype=jnp.bfloat16, out_dtype=None,
             vmem_limit_bytes=None):
    """x: (B, S, H) -> (B, S, 256*3)."""
    w1, b1, gamma, beta, w2, b2 = params
    B, S, H = x.shape
    out_feat = w2.shape[1]
    if out_dtype is None:
        # bf16 output halves the dominant HBM write stream; pass f32 for parity.
        out_dtype = compute_dtype

    f32 = jnp.float32
    # Fold LayerNorm gamma/beta into the decoder (mathematically exact):
    #   (hn*g + b) @ W2 + b2 == hn @ (diag(g)·W2) + (b @ W2 + b2)
    w2_f32 = w2.astype(f32)
    w2_fold = (gamma.astype(f32).reshape(H, 1) * w2_f32).astype(compute_dtype)
    b2_fold = beta.astype(f32).reshape(1, H) @ w2_f32 \
        + b2.astype(f32).reshape(1, out_feat)

    w1_c = w1.astype(compute_dtype)
    b1_f = b1.astype(f32).reshape(1, H)

    xf = x.reshape(B * S, H).astype(compute_dtype)
    M = xf.shape[0]

    # Row tile selection. No wrapper-side padding: either the block exactly
    # covers all rows, or the tile is a multiple of the sublane granularity and
    # Pallas masks the ragged tail block (the math is purely row-wise).
    itemsize = jnp.dtype(compute_dtype).itemsize
    sub = 8 if itemsize >= 4 else (16 if itemsize == 2 else 32)
    if M < 2 * sub:
        tm_eff = M                      # single exact block (block dims == array dims)
    else:
        # Multiple-of-`sub` tile, capped so the grid has >= 2 steps — lets the
        # "parallel" axis shard across v7x's two TensorCores (harmless on v5e/v6e).
        tm_eff = min((tm // sub) * sub, _cdiv(_cdiv(M, 2), sub) * sub)
        tm_eff = max(sub, tm_eff)
    grid_m = _cdiv(M, tm_eff)

    in_sz = jnp.dtype(compute_dtype).itemsize
    w_sz = jnp.dtype(compute_dtype).itemsize
    out_sz = jnp.dtype(out_dtype).itemsize

    if vmem_limit_bytes is None:
        tile_bytes = (
            2 * tm_eff * H * in_sz                     # double-buffered x tile
            + 2 * tm_eff * out_feat * out_sz           # double-buffered out tile
            + 2 * (H * H + H * out_feat) * w_sz        # weights (2 bufs each)
            + 2 * (H + out_feat) * 4                   # f32 biases (2 bufs each)
            + tm_eff * (3 * H + out_feat) * 4)         # f32 h / hn / y intermediates
        # Cap comfortably below v7x's 64 MiB physical VMEM per TensorCore.
        # Pass an explicit (larger) limit + bigger tm to exploit v5e/v6e's 128 MiB.
        vmem_limit_bytes = min(max(int(tile_bytes) + (4 << 20), 8 << 20), 40 << 20)

    cost = pl.CostEstimate(
        flops=int(2 * M * H * (H + out_feat)),
        transcendentals=int(M * H),
        bytes_accessed=int(M * H * in_sz + M * out_feat * out_sz
                           + (H * H + H * out_feat) * w_sz
                           + (H + out_feat) * 4),
    )

    out = pl.pallas_call(
        mpp_head_kernel,
        out_shape=jax.ShapeDtypeStruct((M, out_feat), out_dtype),
        grid_spec=pl.GridSpec(
            grid=(grid_m,),
            in_specs=[
                pl.BlockSpec((tm_eff, H), lambda i: (i, 0)),       # x rows
                pl.BlockSpec((H, H), lambda i: (0, 0)),            # w1 (resident)
                pl.BlockSpec((1, H), lambda i: (0, 0)),            # b1 (f32)
                pl.BlockSpec((H, out_feat), lambda i: (0, 0)),     # w2' (resident)
                pl.BlockSpec((1, out_feat), lambda i: (0, 0)),     # b2' (f32)
            ],
            out_specs=pl.BlockSpec((tm_eff, out_feat), lambda i: (i, 0)),
        ),
        compiler_params=pltpu.CompilerParams(
            dimension_semantics=("parallel",),
            vmem_limit_bytes=vmem_limit_bytes),
        cost_estimate=cost,
    )(xf, w1_c, b1_f, w2_fold, b2_fold)

    return out.reshape(B, S, out_feat)


def init_params(key, hidden=HIDDEN, out=OUT, dtype=jnp.float32):
    k1, k2 = jax.random.split(key, 2)
    # weights stored as (in_features, out_features)
    w1 = jax.random.normal(k1, (hidden, hidden), dtype) * 0.02
    b1 = jnp.zeros((1, hidden), dtype)
    gamma = jnp.ones((1, hidden), dtype)
    beta = jnp.zeros((1, hidden), dtype)
    w2 = jax.random.normal(k2, (hidden, out), dtype) * 0.02
    b2 = jnp.zeros((1, out), dtype)
    return (w1, b1, gamma, beta, w2, b2)


def mpp_head_ref(x, params):
    """Pure-JAX f32 reference for correctness check."""
    w1, b1, gamma, beta, w2, b2 = params
    f32 = jnp.float32
    h = x.astype(f32) @ w1.astype(f32) + b1.astype(f32)
    h = _gelu(h)
    mu = jnp.mean(h, axis=-1, keepdims=True)
    var = jnp.mean((h - mu) ** 2, axis=-1, keepdims=True)
    h = (h - mu) / jnp.sqrt(var + LN_EPS)
    h = h * gamma.astype(f32) + beta.astype(f32)
    return h @ w2.astype(f32) + b2.astype(f32)


if __name__ == "__main__":
    key = jax.random.PRNGKey(0)
    kx, kp, kx2 = jax.random.split(key, 3)

    params = init_params(kp)

    # Case 1: nominal small shape (B, S, H) = (2, 8, 32)
    B, S, H = 2, 8, HIDDEN
    x = jax.random.normal(kx, (B, S, H), jnp.float32)
    ref = mpp_head_ref(x, params)

    # 1a) default bf16 fast path (bf16 MXU operands + bf16 output)
    out_bf16 = jax.block_until_ready(mpp_head(x, params))
    assert out_bf16.shape == (B, S, OUT)
    assert jnp.allclose(out_bf16.astype(jnp.float32), ref, atol=3e-2, rtol=3e-2), \
        "mismatch vs reference (bf16 path, case 1)"

    # 1b) f32 path, strict parity with the reference
    out_f32 = jax.block_until_ready(
        mpp_head(x, params, compute_dtype=jnp.float32, out_dtype=jnp.float32))
    assert jnp.allclose(out_f32, ref, atol=1e-4, rtol=1e-4), \
        "mismatch vs reference (f32 path, case 1)"

    # Case 2: row count not a multiple of 8/16 (exercises the no-pad path)
    B2, S2 = 3, 5
    x2 = jax.random.normal(kx2, (B2, S2, H), jnp.float32)
    out2 = jax.block_until_ready(mpp_head(x2, params))
    ref2 = mpp_head_ref(x2, params)
    assert out2.shape == (B2, S2, OUT)
    assert jnp.allclose(out2.astype(jnp.float32), ref2, atol=3e-2, rtol=3e-2), \
        "mismatch vs reference (case 2)"

    print("KERNEL_OK")
</pallas_src>

<mosaic_0001>
module attributes {stable_mosaic.version = 11 : i64} {
  func.func @mpp_head_kernel(%arg0: i32, %arg1: memref<16x32xbf16, #tpu.memory_space<vmem>>, %arg2: memref<32x32xbf16, #tpu.memory_space<vmem>>, %arg3: memref<1x32xf32, #tpu.memory_space<vmem>>, %arg4: memref<32x768xbf16, #tpu.memory_space<vmem>>, %arg5: memref<1x768xf32, #tpu.memory_space<vmem>>, %arg6: memref<16x768xbf16, #tpu.memory_space<vmem>>) attributes {dimension_semantics = [#tpu.dimension_semantics<parallel>], iteration_bounds = array<i64: 1>, scalar_prefetch = 0 : i64, scratch_operands = 0 : i64, tpu.core_type = #tpu.core_type<tc>, window_params = [{transform_indices = @transform_0, window_bounds = array<i64: 16, 32>}, {pipeline_mode = #tpu.pipeline_mode<synchronous>, transform_indices = @transform_1, window_bounds = array<i64: 32, 32>}, {pipeline_mode = #tpu.pipeline_mode<synchronous>, transform_indices = @transform_2, window_bounds = array<i64: 1, 32>}, {pipeline_mode = #tpu.pipeline_mode<synchronous>, transform_indices = @transform_3, window_bounds = array<i64: 32, 768>}, {pipeline_mode = #tpu.pipeline_mode<synchronous>, transform_indices = @transform_4, window_bounds = array<i64: 1, 768>}, {transform_indices = @transform_5, window_bounds = array<i64: 16, 768>}]} {
    %c0 = arith.constant 0 : index
    %c0_0 = arith.constant 0 : index
    %0 = vector.load %arg1[%c0, %c0_0] : memref<16x32xbf16, #tpu.memory_space<vmem>>, vector<16x32xbf16>
    %c0_1 = arith.constant 0 : index
    %c0_2 = arith.constant 0 : index
    %1 = vector.load %arg2[%c0_1, %c0_2] : memref<32x32xbf16, #tpu.memory_space<vmem>>, vector<32x32xbf16>
    %cst = arith.constant dense<0.000000e+00> : vector<16x32xf32>
    %2 = tpu.matmul %0, %1, %cst {dimension_numbers = #tpu.dot_dimension_numbers<[1], [0], [0], [1], [0, 0, 1, 1], [], []>} : vector<16x32xbf16>, vector<32x32xbf16>, vector<16x32xf32> -> vector<16x32xf32>
    %c0_3 = arith.constant 0 : index
    %c0_4 = arith.constant 0 : index
    %3 = vector.load %arg3[%c0_3, %c0_4] : memref<1x32xf32, #tpu.memory_space<vmem>>, vector<1x32xf32>
    %4 = vector.broadcast %3 : vector<1x32xf32> to vector<16x32xf32>
    %5 = arith.addf %2, %4 : vector<16x32xf32>
    %6 = arith.mulf %5, %5 : vector<16x32xf32>
    %7 = arith.mulf %5, %6 : vector<16x32xf32>
    %cst_5 = arith.constant 4.471500e-02 : f32
    %8 = vector.broadcast %cst_5 : f32 to vector<16x32xf32>
    %9 = arith.mulf %8, %7 : vector<16x32xf32>
    %10 = arith.addf %5, %9 : vector<16x32xf32>
    %cst_6 = arith.constant 0.797884583 : f32
    %11 = vector.broadcast %cst_6 : f32 to vector<16x32xf32>
    %12 = arith.mulf %11, %10 : vector<16x32xf32>
    %13 = math.tanh %12 : vector<16x32xf32>
    %cst_7 = arith.constant 1.000000e+00 : f32
    %14 = vector.broadcast %cst_7 : f32 to vector<16x32xf32>
    %15 = arith.addf %14, %13 : vector<16x32xf32>
    %cst_8 = arith.constant 5.000000e-01 : f32
    %16 = vector.broadcast %cst_8 : f32 to vector<16x32xf32>
    %17 = arith.mulf %16, %15 : vector<16x32xf32>
    %18 = arith.mulf %5, %17 : vector<16x32xf32>
    %cst_9 = arith.constant dense<0.000000e+00> : vector<16xf32>
    %19 = vector.multi_reduction <add>, %18, %cst_9 [1] : vector<16x32xf32> to vector<16xf32>
    %20 = vector.shape_cast %19 : vector<16xf32> to vector<16x1xf32>
    %cst_10 = arith.constant 3.125000e-02 : f32
    %21 = vector.broadcast %cst_10 : f32 to vector<16x1xf32>
    %22 = arith.mulf %20, %21 : vector<16x1xf32>
    %23 = arith.mulf %18, %18 : vector<16x32xf32>
    %cst_11 = arith.constant dense<0.000000e+00> : vector<16xf32>
    %24 = vector.multi_reduction <add>, %23, %cst_11 [1] : vector<16x32xf32> to vector<16xf32>
    %25 = vector.shape_cast %24 : vector<16xf32> to vector<16x1xf32>
    %cst_12 = arith.constant 3.125000e-02 : f32
    %26 = vector.broadcast %cst_12 : f32 to vector<16x1xf32>
    %27 = arith.mulf %25, %26 : vector<16x1xf32>
    %28 = arith.mulf %22, %22 : vector<16x1xf32>
    %29 = arith.subf %27, %28 : vector<16x1xf32>
    %cst_13 = arith.constant 0.000000e+00 : f32
    %30 = vector.broadcast %cst_13 : f32 to vector<16x1xf32>
    %31 = arith.maximumf %29, %30 : vector<16x1xf32>
    %32 = vector.broadcast %22 : vector<16x1xf32> to vector<16x32xf32>
    %33 = arith.subf %18, %32 : vector<16x32xf32>
    %cst_14 = arith.constant 9.99999996E-13 : f32
    %34 = vector.broadcast %cst_14 : f32 to vector<16x1xf32>
    %35 = arith.addf %31, %34 : vector<16x1xf32>
    %36 = math.rsqrt %35 : vector<16x1xf32>
    %37 = vector.broadcast %36 : vector<16x1xf32> to vector<16x32xf32>
    %38 = arith.mulf %33, %37 : vector<16x32xf32>
    %39 = arith.truncf %38 : vector<16x32xf32> to vector<16x32xbf16>
    %c0_15 = arith.constant 0 : index
    %c0_16 = arith.constant 0 : index
    %40 = vector.load %arg4[%c0_15, %c0_16] : memref<32x768xbf16, #tpu.memory_space<vmem>>, vector<32x768xbf16>
    %cst_17 = arith.constant dense<0.000000e+00> : vector<16x768xf32>
    %41 = tpu.matmul %39, %40, %cst_17 {dimension_numbers = #tpu.dot_dimension_numbers<[1], [0], [0], [1], [0, 0, 1, 1], [], []>} : vector<16x32xbf16>, vector<32x768xbf16>, vector<16x768xf32> -> vector<16x768xf32>
    %c0_18 = arith.constant 0 : index
    %c0_19 = arith.constant 0 : index
    %42 = vector.load %arg5[%c0_18, %c0_19] : memref<1x768xf32, #tpu.memory_space<vmem>>, vector<1x768xf32>
    %43 = vector.broadcast %42 : vector<1x768xf32> to vector<16x768xf32>
    %44 = arith.addf %41, %43 : vector<16x768xf32>
    %45 = arith.truncf %44 : vector<16x768xf32> to vector<16x768xbf16>
    %c0_20 = arith.constant 0 : index
    %c0_21 = arith.constant 0 : index
    %46 = vector.load %arg6[%c0_20, %c0_21] : memref<16x768xbf16, #tpu.memory_space<vmem>>, vector<16x768xbf16>
    tpu.vector_store %arg6[%c0_20, %c0_21], %45 {strides = array<i32>} : memref<16x768xbf16, #tpu.memory_space<vmem>>, vector<16x768xbf16>,
    return
  }
  func.func @transform_0(%arg0: i32) -> (i32, i32) {
    %c0_i32 = arith.constant 0 : i32
    %c0_i32_0 = arith.constant 0 : i32
    return %arg0, %c0_i32 : i32, i32
  }
  func.func @transform_1(%arg0: i32) -> (i32, i32) {
    %c0_i32 = arith.constant 0 : i32
    %c0_i32_0 = arith.constant 0 : i32
    %c0_i32_1 = arith.constant 0 : i32
    return %c0_i32, %c0_i32_0 : i32, i32
  }
  func.func @transform_2(%arg0: i32) -> (i32, i32) {
    %c0_i32 = arith.constant 0 : i32
    %c0_i32_0 = arith.constant 0 : i32
    %c0_i32_1 = arith.constant 0 : i32
    return %c0_i32, %c0_i32_0 : i32, i32
  }
  func.func @transform_3(%arg0: i32) -> (i32, i32) {
    %c0_i32 = arith.constant 0 : i32
    %c0_i32_0 = arith.constant 0 : i32
    %c0_i32_1 = arith.constant 0 : i32
    return %c0_i32, %c0_i32_0 : i32, i32
  }
  func.func @transform_4(%arg0: i32) -> (i32, i32) {
    %c0_i32 = arith.constant 0 : i32
    %c0_i32_0 = arith.constant 0 : i32
    %c0_i32_1 = arith.constant 0 : i32
    return %c0_i32, %c0_i32_0 : i32, i32
  }
  func.func @transform_5(%arg0: i32) -> (i32, i32) {
    %c0_i32 = arith.constant 0 : i32
    %c0_i32_0 = arith.constant 0 : i32
    return %arg0, %c0_i32 : i32, i32
  }
}

</mosaic_0001>

<llo_original>
// kernel: tpu_custom_call.1
$region0: #{tpu_custom_call.1}
  #allocation0 [shape = 'u32[]', space=smem, size = 0x4, offset = 0x4, fixed_abs, tag = 'smem constant byte address 0x4 - core index']
  #allocation1 [shape = 'u32[144,128]{1,0:T(1,128)}', space=vmem, size = 0x12000, scoped, tag = 'internal scratch']
  %s0 = inlined_call_operand.hbm [shape: bf16[16,32], index: 0, kind: input, shape index: {}]
  %s1 = inlined_call_operand.hbm [shape: bf16[32,32], index: 1, kind: input, shape index: {}]
  %s2 = inlined_call_operand.vmem [shape: f32[1,32], index: 2, kind: input, shape index: {}]
  %s3 = inlined_call_operand.hbm [shape: bf16[32,768], index: 3, kind: input, shape index: {}]
  %s4 = inlined_call_operand.vmem [shape: f32[1,768], index: 4, kind: input, shape index: {}]
  %s5 = inlined_call_operand.hbm [shape: bf16[16,768], index: 5, kind: output, shape index: {}]
  %s6 = sld [smem:[#allocation0]]
  $region42: #{tpu_custom_call.1} parent=0
    _
  %s8 = ssub.s32 1, %s6
  %s9 = scalar_select 0, %s8, %s6
  $region1: #{tpu_custom_call.1} parent=0
    #allocation2 [shape = 'u8[4096]{0}', space=vmem, size = 0x1000, scoped, tag = 'input window, operand 0, single buffered']
    #allocation3 [shape = 's32[1]{0}', space=sflag, size = 0x4, scoped, tag = 'scoped memory for tpu_custom_call.1']
    #allocation4 [shape = 's32[1]{0}', space=sflag, size = 0x4, scoped, tag = 'scoped memory for tpu_custom_call.1']
    #allocation5 [shape = 'u8[8192]{0}', space=vmem, size = 0x2000, scoped, tag = 'input window, operand 1, single buffered']
    #allocation6 [shape = 's32[1]{0}', space=sflag, size = 0x4, scoped, tag = 'scoped memory for tpu_custom_call.1']
    #allocation7 [shape = 'u8[49152]{0}', space=vmem, size = 0xc000, scoped, tag = 'input window, operand 3, single buffered']
    #allocation8 [shape = 'u8[24576]{0}', space=vmem, size = 0x6000, scoped, tag = 'output window, operand 0, single buffered']
    %10 = vsyncpa [#allocation3], 0
    %11 = vsyncpa [#allocation6], 0
    %12 = vsyncpa [#allocation4], 0
    // Predicated region
    $region2: #{tpu_custom_call.1} parent=1 // pred_check
      _
    $region3: #{tpu_custom_call.1} parent=1 // pred_check_branch
      %14 = sbr.rel (0) target = $region5
    $region4: #{tpu_custom_call.1} parent=1 // pred_region
      %s16 = ssub.s32 128, 128
      %17 = vsyncadd [#allocation3], %s16
      %s18 = sshll.u32 [#allocation2], 4
      %s19 = int_to_ptr.vmem [resolvable:$true] %s18
      %24 = dma.hbm_to_vmem [thread:$0]  %s0, 128, %s19, [#allocation3], 64, 64, 4
    $region5: #{tpu_custom_call.1} parent=1 // pred_fallthru
      _
    // Predicated region
    $region6: #{tpu_custom_call.1} parent=1 // pred_check
      _
    $region7: #{tpu_custom_call.1} parent=1 // pred_check_branch
      %26 = sbr.rel (0) target = $region9
    $region8: #{tpu_custom_call.1} parent=1 // pred_region
      %s28 = ssub.s32 256, 256
      %29 = vsyncadd [#allocation6], %s28
      %s30 = sshll.u32 [#allocation5], 4
      %s31 = int_to_ptr.vmem [resolvable:$true] %s30
      %36 = dma.hbm_to_vmem [thread:$0]  %s1, 256, %s31, [#allocation6], 64, 64, 4
    $region9: #{tpu_custom_call.1} parent=1 // pred_fallthru
      _
    // Predicated region
    $region10: #{tpu_custom_call.1} parent=1 // pred_check
      _
    $region11: #{tpu_custom_call.1} parent=1 // pred_check_branch
      %38 = sbr.rel (0) target = $region13
    $region12: #{tpu_custom_call.1} parent=1 // pred_region
      _
    $region13: #{tpu_custom_call.1} parent=1 // pred_fallthru
      _
    // Predicated region
    $region14: #{tpu_custom_call.1} parent=1 // pred_check
      _
    $region15: #{tpu_custom_call.1} parent=1 // pred_check_branch
      %40 = sbr.rel (0) target = $region17
    $region16: #{tpu_custom_call.1} parent=1 // pred_region
      %s42 = ssub.s32 1536, 1536
      %43 = vsyncadd [#allocation6], %s42
      %s44 = sshll.u32 [#allocation7], 4
      %s45 = int_to_ptr.vmem [resolvable:$true] %s44
      %50 = dma.hbm_to_vmem [thread:$0]  %s3, 1536, %s45, [#allocation6], 384, 384, 24
    $region17: #{tpu_custom_call.1} parent=1 // pred_fallthru
      _
    // Predicated region
    $region18: #{tpu_custom_call.1} parent=1 // pred_check
      _
    $region19: #{tpu_custom_call.1} parent=1 // pred_check_branch
      %52 = sbr.rel (0) target = $region21
    $region20: #{tpu_custom_call.1} parent=1 // pred_region
      _
    $region21: #{tpu_custom_call.1} parent=1 // pred_fallthru
      _
    // Predicated region
    $region22: #{tpu_custom_call.1} parent=1 // pred_check
      _
    $region23: #{tpu_custom_call.1} parent=1 // pred_check_branch
      %54 = sbr.rel (0) target = $region25
    $region24: #{tpu_custom_call.1} parent=1 // pred_region
      %55 = dma.done [#allocation3], 128
    $region25: #{tpu_custom_call.1} parent=1 // pred_fallthru
      _
    // Predicated region
    $region26: #{tpu_custom_call.1} parent=1 // pred_check
      _
    $region27: #{tpu_custom_call.1} parent=1 // pred_check_branch
      %57 = sbr.rel (0) target = $region29
    $region28: #{tpu_custom_call.1} parent=1 // pred_region
      %58 = dma.done [#allocation6], 256
    $region29: #{tpu_custom_call.1} parent=1 // pred_fallthru
      _
    // Predicated region
    $region30: #{tpu_custom_call.1} parent=1 // pred_check
      _
    $region31: #{tpu_custom_call.1} parent=1 // pred_check_branch
      %60 = sbr.rel (0) target = $region33
    $region32: #{tpu_custom_call.1} parent=1 // pred_region
      %61 = dma.done [#allocation6], 1536
    $region33: #{tpu_custom_call.1} parent=1 // pred_fallthru
      _
    %v63 = vld [vmem:[#allocation2] sm:$0xf]
    %v64 = vld [vmem:[#allocation2 + $0x4] sm:$0xf]
    %v65 = vld [vmem:[#allocation5] sm:$0xf]
    %v66 = vld [vmem:[#allocation5 + $0x4] sm:$0xf]
    %v67 = vld [vmem:[#allocation5 + $0x8] sm:$0xf]
    %v68 = vld [vmem:[#allocation5 + $0xc] sm:$0xf]
    %v69 = vld [vmem:[%s2] sm:$0x1]
    %v71 = vlaneseq
    %v72 = vshrl.u32 %v71, 7
    %v73 = vsub.s32 0, %v72
    %v74 = vrot.slane %v69, %v73
    %v78 = vunpack.c.l.b16 %v63
    %v79 = vunpack.c.l.b16 %v64
    %v80 = vpack.c.b16 %v79, %v78
    %v85 = vunpack.c.l.b16 %v65
    %v86 = vunpack.c.l.b16 %v66
    %v87 = vunpack.c.l.b16 %v67
    %v88 = vunpack.c.l.b16 %v68
    %v89 = vpack.c.b16 %v86, %v85
    %v90 = vpack.c.b16 %v88, %v87
    %vm93 = vcmask 261120
    %v95 = vsel %vm93, %v80, 0
    %97 = vmatprep.subr.bf16.mxu0 0
    %98 = vmatpush1.bf16.msra.mxu0 %v89
    %99 = vmatprep.subr.bf16.mxu0 0
    %100 = vmatpush1.bf16.msra.mxu0 %v90
    %101 = vmatprep.subr.bf16.mxu0 0
    %102 = vmatpush1.bf16.msra.mxu0 0
    %103 = vmatprep.subr.bf16.mxu0 0
    %104 = vmatpush1.bf16.msra.mxu0 0
    %105 = vmatprep.subr.bf16.mxu0 0
    %106 = vmatpush1.bf16.msra.mxu0 0
    %107 = vmatprep.subr.bf16.mxu0 0
    %108 = vmatpush1.bf16.msra.mxu0 0
    %109 = vmatprep.subr.bf16.mxu0 0
    %110 = vmatpush1.bf16.msra.mxu0 0
    %111 = vmatprep.subr.bf16.mxu0 0
    %112 = vmatpush1.bf16.msra.mxu0 0
    %113 = vmatprep.subr.bf16.mxu0 0
    %114 = vmatpush1.bf16.msra.mxu0 0
    %115 = vmatprep.subr.bf16.mxu0 0
    %116 = vmatpush1.bf16.msra.mxu0 0
    %117 = vmatprep.subr.bf16.mxu0 0
    %118 = vmatpush1.bf16.msra.mxu0 0
    %119 = vmatprep.subr.bf16.mxu0 0
    %120 = vmatpush1.bf16.msra.mxu0 0
    %121 = vmatprep.subr.bf16.mxu0 0
    %122 = vmatpush1.bf16.msra.mxu0 0
    %123 = vmatprep.subr.bf16.mxu0 0
    %124 = vmatpush1.bf16.msra.mxu0 0
    %125 = vmatprep.subr.bf16.mxu0 0
    %126 = vmatpush1.bf16.msra.mxu0 0
    %127 = vmatprep.subr.bf16.mxu0 0
    %128 = vmatpush1.bf16.msra.mxu0 0
    %129 = vmatprep.mubr.bf16.mxu0 0
    %130 = vmatmul.mubr.bf16.gmra.mrb[0].mxu0 %v95
    %v131 = vpop.f32.mrb[0].mxu0
    %v132 = vadd.f32 %v74, %v131
    %v133 = vpop.f32.mrb[0].mxu0
    %v134 = vpop.f32.mrb[0].mxu0
    %v135 = vadd.f32 %v74, %v134
    %v136 = vpop.f32.mrb[0].mxu0
    %137 = vdwg.mxu0
    %v138 = vmul.f32 %v132, %v132
    %v139 = vmul.f32 %v135, %v135
    %v140 = vmul.f32 %v132, %v138
    %v141 = vmul.f32 %v135, %v139
    %v142 = vmul.f32 %v140, 0.044715
    %v143 = vmul.f32 %v141, 0.044715
    %v144 = vadd.f32 %v132, %v142
    %v145 = vadd.f32 %v135, %v143
    %v146 = vmul.f32 %v144, 0.7978846
    %v147 = vmul.f32 %v145, 0.7978846
    %v148 = vtanh.pop %v146
    %v149 = vtanh.pop %v147
    %v150 = vadd.f32 %v148, 1.0
    %v151 = vadd.f32 %v149, 1.0
    %v152 = vmul.f32 %v150, 0.5
    %v153 = vmul.f32 %v151, 0.5
    %v154 = vmul.f32 %v132, %v152
    %v155 = vmul.f32 %v135, %v153
    %v156 = vsel %vm93, %v154, 0.0
    %157 = vadd.xlane.f32.xlu0 %v156
    %v158 = vpop.xlane.xlu0 %157
    %v159 = vsel %vm93, %v155, 0.0
    %160 = vadd.xlane.f32.xlu0 %v159
    %v161 = vpop.xlane.xlu0 %160
    %v162 = vmul.f32 %v158, 0.03125
    %v163 = vmul.f32 %v161, 0.03125
    %v164 = vmul.f32 %v154, %v154
    %v165 = vmul.f32 %v155, %v155
    %v166 = vsel %vm93, %v164, 0.0
    %167 = vadd.xlane.f32.xlu0 %v166
    %v168 = vpop.xlane.xlu0 %167
    %v169 = vsel %vm93, %v165, 0.0
    %170 = vadd.xlane.f32.xlu0 %v169
    %v171 = vpop.xlane.xlu0 %170
    %v172 = vmul.f32 %v168, 0.03125
    %v173 = vmul.f32 %v171, 0.03125
    %v174 = vmul.f32 %v162, %v162
    %v175 = vmul.f32 %v163, %v163
    %v176 = vsub.f32 %v172, %v174
    %v177 = vsub.f32 %v173, %v175
    %v178 = vmax.f32 %v176, 0.0
    %v179 = vmax.f32 %v177, 0.0
    %v180 = vsub.f32 %v154, %v162
    %v181 = vsub.f32 %v155, %v163
    %v182 = vadd.f32 %v178, 1e-12
    %v183 = vadd.f32 %v179, 1e-12
    %v184 = vrsqrt.pop %v182
    %v185 = vrsqrt.pop %v183
    %v186 = vmul.f32 %v180, %v184
    %v187 = vmul.f32 %v181, %v185
    %v188 = vpack.c.bf16 %v187, %v186
    %v189 = vld [vmem:[#allocation7] sm:$0xff]
    %v190 = vld [vmem:[#allocation7 + $0x8] sm:$0xff]
    %v191 = vld [vmem:[#allocation7 + $0x10] sm:$0xff]
    %v192 = vld [vmem:[#allocation7 + $0x18] sm:$0xff]
    %v193 = vld [vmem:[#allocation7 + $0x20] sm:$0xff]
    %v194 = vld [vmem:[#allocation7 + $0x28] sm:$0xff]
    %v195 = vld [vmem:[#allocation7 + $0x30] sm:$0xff]
    %v196 = vld [vmem:[#allocation7 + $0x38] sm:$0xff]
    %v197 = vld [vmem:[#allocation7 + $0x40] sm:$0xff]
    %v198 = vld [vmem:[#allocation7 + $0x48] sm:$0xff]
    %v199 = vld [vmem:[#allocation7 + $0x50] sm:$0xff]
    %v200 = vld [vmem:[#allocation7 + $0x58] sm:$0xff]
    %v201 = vld [vmem:[%s4] sm:$0x3f]
    %v203 = vlaneseq
    %v204 = vshrl.u32 %v203, 7
    %v205 = vsub.s32 0, %v204
    %v206 = vrot.slane %v201, %v205
    %v207 = vlaneseq
    %v208 = vshrl.u32 %v207, 7
    %v209 = vsub.s32 1, %v208
    %v210 = vrot.slane %v201, %v209
    %v211 = vlaneseq
    %v212 = vshrl.u32 %v211, 7
    %v213 = vsub.s32 2, %v212
    %v214 = vrot.slane %v201, %v213
    %v215 = vlaneseq
    %v216 = vshrl.u32 %v215, 7
    %v217 = vsub.s32 3, %v216
    %v218 = vrot.slane %v201, %v217
    %v219 = vlaneseq
    %v220 = vshrl.u32 %v219, 7
    %v221 = vsub.s32 4, %v220
    %v222 = vrot.slane %v201, %v221
    %v223 = vlaneseq
    %v224 = vshrl.u32 %v223, 7
    %v225 = vsub.s32 5, %v224
    %v226 = vrot.slane %v201, %v225
    %v245 = vunpack.c.l.b16 %v189
    %v246 = vunpack.c.h.b16 %v189
    %v247 = vunpack.c.l.b16 %v190
    %v248 = vunpack.c.h.b16 %v190
    %v249 = vunpack.c.l.b16 %v191
    %v250 = vunpack.c.h.b16 %v191
    %v251 = vunpack.c.l.b16 %v192
    %v252 = vunpack.c.h.b16 %v192
    %v253 = vunpack.c.l.b16 %v193
    %v254 = vunpack.c.h.b16 %v193
    %v255 = vunpack.c.l.b16 %v194
    %v256 = vunpack.c.h.b16 %v194
    %v257 = vunpack.c.l.b16 %v195
    %v258 = vunpack.c.h.b16 %v195
    %v259 = vunpack.c.l.b16 %v196
    %v260 = vunpack.c.h.b16 %v196
    %v261 = vunpack.c.l.b16 %v197
    %v262 = vunpack.c.h.b16 %v197
    %v263 = vunpack.c.l.b16 %v198
    %v264 = vunpack.c.h.b16 %v198
    %v265 = vunpack.c.l.b16 %v199
    %v266 = vunpack.c.h.b16 %v199
    %v267 = vunpack.c.l.b16 %v200
    %v268 = vunpack.c.h.b16 %v200
    %v269 = vpack.c.b16 %v251, %v245
    %v270 = vpack.c.b16 %v252, %v246
    %v271 = vpack.c.b16 %v253, %v247
    %v272 = vpack.c.b16 %v254, %v248
    %v273 = vpack.c.b16 %v255, %v249
    %v274 = vpack.c.b16 %v256, %v250
    %v275 = vpack.c.b16 %v263, %v257
    %v276 = vpack.c.b16 %v264, %v258
    %v277 = vpack.c.b16 %v265, %v259
    %v278 = vpack.c.b16 %v266, %v260
    %v279 = vpack.c.b16 %v267, %v261
    %v280 = vpack.c.b16 %v268, %v262
    %v294 = vsel %vm93, %v188, 0
    %296 = vmatprep.subr.bf16.mxu0 %v270
    %297 = vmatpush1.bf16.msra.mxu0 %v269
    %298 = vmatprep.subr.bf16.mxu0 %v276
    %299 = vmatpush1.bf16.msra.mxu0 %v275
    %300 = vmatprep.subr.bf16.mxu0 0
    %301 = vmatpush1.bf16.msra.mxu0 0
    %302 = vmatprep.subr.bf16.mxu0 0
    %303 = vmatpush1.bf16.msra.mxu0 0
    %304 = vmatprep.subr.bf16.mxu0 0
    %305 = vmatpush1.bf16.msra.mxu0 0
    %306 = vmatprep.subr.bf16.mxu0 0
    %307 = vmatpush1.bf16.msra.mxu0 0
    %308 = vmatprep.subr.bf16.mxu0 0
    %309 = vmatpush1.bf16.msra.mxu0 0
    %310 = vmatprep.subr.bf16.mxu0 0
    %311 = vmatpush1.bf16.msra.mxu0 0
    %312 = vmatprep.subr.bf16.mxu0 0
    %313 = vmatpush1.bf16.msra.mxu0 0
    %314 = vmatprep.subr.bf16.mxu0 0
    %315 = vmatpush1.bf16.msra.mxu0 0
    %316 = vmatprep.subr.bf16.mxu0 0
    %317 = vmatpush1.bf16.msra.mxu0 0
    %318 = vmatprep.subr.bf16.mxu0 0
    %319 = vmatpush1.bf16.msra.mxu0 0
    %320 = vmatprep.subr.bf16.mxu0 0
    %321 = vmatpush1.bf16.msra.mxu0 0
    %322 = vmatprep.subr.bf16.mxu0 0
    %323 = vmatpush1.bf16.msra.mxu0 0
    %324 = vmatprep.subr.bf16.mxu0 0
    %325 = vmatpush1.bf16.msra.mxu0 0
    %326 = vmatprep.subr.bf16.mxu0 0
    %327 = vmatpush1.bf16.msra.mxu0 0
    %328 = vmatprep.mubr.bf16.mxu0 0
    %329 = vmatmul.mubr.bf16.gmra.mrb[0].mxu0 %v294
    %v330 = vpop.f32.mrb[0].mxu0
    %v331 = vadd.f32 %v206, %v330
    %v332 = vpop.f32.mrb[0].mxu0
    %v333 = vadd.f32 %v210, %v332
    %v334 = vpop.f32.mrb[0].mxu0
    %v335 = vadd.f32 %v206, %v334
    %v336 = vpop.f32.mrb[0].mxu0
    %v337 = vadd.f32 %v210, %v336
    %338 = vdwg.mxu0
    %339 = vmatprep.subr.bf16.mxu0 %v272
    %340 = vmatpush1.bf16.msra.mxu0 %v271
    %341 = vmatprep.subr.bf16.mxu0 %v278
    %342 = vmatpush1.bf16.msra.mxu0 %v277
    %343 = vmatprep.subr.bf16.mxu0 0
    %344 = vmatpush1.bf16.msra.mxu0 0
    %345 = vmatprep.subr.bf16.mxu0 0
    %346 = vmatpush1.bf16.msra.mxu0 0
    %347 = vmatprep.subr.bf16.mxu0 0
    %348 = vmatpush1.bf16.msra.mxu0 0
    %349 = vmatprep.subr.bf16.mxu0 0
    %350 = vmatpush1.bf16.msra.mxu0 0
    %351 = vmatprep.subr.bf16.mxu0 0
    %352 = vmatpush1.bf16.msra.mxu0 0
    %353 = vmatprep.subr.bf16.mxu0 0
    %354 = vmatpush1.bf16.msra.mxu0 0
    %355 = vmatprep.subr.bf16.mxu0 0
    %356 = vmatpush1.bf16.msra.mxu0 0
    %357 = vmatprep.subr.bf16.mxu0 0
    %358 = vmatpush1.bf16.msra.mxu0 0
    %359 = vmatprep.subr.bf16.mxu0 0
    %360 = vmatpush1.bf16.msra.mxu0 0
    %361 = vmatprep.subr.bf16.mxu0 0
    %362 = vmatpush1.bf16.msra.mxu0 0
    %363 = vmatprep.subr.bf16.mxu0 0
    %364 = vmatpush1.bf16.msra.mxu0 0
    %365 = vmatprep.subr.bf16.mxu0 0
    %366 = vmatpush1.bf16.msra.mxu0 0
    %367 = vmatprep.subr.bf16.mxu0 0
    %368 = vmatpush1.bf16.msra.mxu0 0
    %369 = vmatprep.subr.bf16.mxu0 0
    %370 = vmatpush1.bf16.msra.mxu0 0
    %371 = vmatprep.mubr.bf16.mxu0 0
    %372 = vmatmul.mubr.bf16.gmra.mrb[0].mxu0 %v294
    %v373 = vpop.f32.mrb[0].mxu0
    %v374 = vadd.f32 %v214, %v373
    %v375 = vpop.f32.mrb[0].mxu0
    %v376 = vadd.f32 %v218, %v375
    %v377 = vpop.f32.mrb[0].mxu0
    %v378 = vadd.f32 %v214, %v377
    %v379 = vpop.f32.mrb[0].mxu0
    %v380 = vadd.f32 %v218, %v379
    %381 = vdwg.mxu0
    %382 = vmatprep.subr.bf16.mxu0 %v274
    %383 = vmatpush1.bf16.msra.mxu0 %v273
    %384 = vmatprep.subr.bf16.mxu0 %v280
    %385 = vmatpush1.bf16.msra.mxu0 %v279
    %386 = vmatprep.subr.bf16.mxu0 0
    %387 = vmatpush1.bf16.msra.mxu0 0
    %388 = vmatprep.subr.bf16.mxu0 0
    %389 = vmatpush1.bf16.msra.mxu0 0
    %390 = vmatprep.subr.bf16.mxu0 0
    %391 = vmatpush1.bf16.msra.mxu0 0
    %392 = vmatprep.subr.bf16.mxu0 0
    %393 = vmatpush1.bf16.msra.mxu0 0
    %394 = vmatprep.subr.bf16.mxu0 0
    %395 = vmatpush1.bf16.msra.mxu0 0
    %396 = vmatprep.subr.bf16.mxu0 0
    %397 = vmatpush1.bf16.msra.mxu0 0
    %398 = vmatprep.subr.bf16.mxu0 0
    %399 = vmatpush1.bf16.msra.mxu0 0
    %400 = vmatprep.subr.bf16.mxu0 0
    %401 = vmatpush1.bf16.msra.mxu0 0
    %402 = vmatprep.subr.bf16.mxu0 0
    %403 = vmatpush1.bf16.msra.mxu0 0
    %404 = vmatprep.subr.bf16.mxu0 0
    %405 = vmatpush1.bf16.msra.mxu0 0
    %406 = vmatprep.subr.bf16.mxu0 0
    %407 = vmatpush1.bf16.msra.mxu0 0
    %408 = vmatprep.subr.bf16.mxu0 0
    %409 = vmatpush1.bf16.msra.mxu0 0
    %410 = vmatprep.subr.bf16.mxu0 0
    %411 = vmatpush1.bf16.msra.mxu0 0
    %412 = vmatprep.subr.bf16.mxu0 0
    %413 = vmatpush1.bf16.msra.mxu0 0
    %414 = vmatprep.mubr.bf16.mxu0 0
    %415 = vmatmul.mubr.bf16.gmra.mrb[0].mxu0 %v294
    %v416 = vpop.f32.mrb[0].mxu0
    %v417 = vadd.f32 %v222, %v416
    %v418 = vpop.f32.mrb[0].mxu0
    %v419 = vadd.f32 %v226, %v418
    %v420 = vpop.f32.mrb[0].mxu0
    %v421 = vadd.f32 %v222, %v420
    %v422 = vpop.f32.mrb[0].mxu0
    %v423 = vadd.f32 %v226, %v422
    %424 = vdwg.mxu0
    %v425 = vpack.c.bf16 %v335, %v331
    %v426 = vpack.c.bf16 %v337, %v333
    %v427 = vpack.c.bf16 %v378, %v374
    %v428 = vpack.c.bf16 %v380, %v376
    %v429 = vpack.c.bf16 %v421, %v417
    %v430 = vpack.c.bf16 %v423, %v419
    %v437 = vunpack.c.l.b16 %v425
    %v438 = vunpack.c.l.b16 %v426
    %v439 = vunpack.c.l.b16 %v427
    %v440 = vunpack.c.l.b16 %v428
    %v441 = vunpack.c.l.b16 %v429
    %v442 = vunpack.c.l.b16 %v430
    %v443 = vunpack.c.h.b16 %v425
    %v444 = vunpack.c.h.b16 %v426
    %v445 = vunpack.c.h.b16 %v427
    %v446 = vunpack.c.h.b16 %v428
    %v447 = vunpack.c.h.b16 %v429
    %v448 = vunpack.c.h.b16 %v430
    %v449 = vpack.c.b16 %v438, %v437
    %v450 = vpack.c.b16 %v440, %v439
    %v451 = vpack.c.b16 %v442, %v441
    %v452 = vpack.c.b16 %v444, %v443
    %v453 = vpack.c.b16 %v446, %v445
    %v454 = vpack.c.b16 %v448, %v447
    %461 = vst [vmem:[#allocation8] sm:$0xff] %v449
    %462 = vst [vmem:[#allocation8 + $0x8] sm:$0xff] %v450
    %463 = vst [vmem:[#allocation8 + $0x10] sm:$0xff] %v451
    %464 = vst [vmem:[#allocation8 + $0x18] sm:$0xff] %v452
    %465 = vst [vmem:[#allocation8 + $0x20] sm:$0xff] %v453
    %466 = vst [vmem:[#allocation8 + $0x28] sm:$0xff] %v454
    // Predicated region
    $region34: #{tpu_custom_call.1} parent=1 // pred_check
      _
    $region35: #{tpu_custom_call.1} parent=1 // pred_check_branch
      %468 = sbr.rel (0) target = $region37
    $region36: #{tpu_custom_call.1} parent=1 // pred_region
      %s470 = ssub.s32 768, 768
      %471 = vsyncadd [#allocation4], %s470
      %s472 = sshll.u32 [#allocation8], 4
      %s473 = int_to_ptr.vmem [resolvable:$true] %s472
      %478 = dma.vmem_to_hbm [thread:$0]  %s473, 768, %s5, [#allocation4], 384, 384, 24
    $region37: #{tpu_custom_call.1} parent=1 // pred_fallthru
      _
    // Predicated region
    $region38: #{tpu_custom_call.1} parent=1 // pred_check
      _
    $region39: #{tpu_custom_call.1} parent=1 // pred_check_branch
      %480 = sbr.rel (0) target = $region41
    $region40: #{tpu_custom_call.1} parent=1 // pred_region
      %481 = dma.done [#allocation4], 768
    $region41: #{tpu_custom_call.1} parent=1 // pred_fallthru
      _
    %482 = vsyncpa [#allocation3], 1
    %483 = vsyncpa [#allocation6], 1
    %484 = vsyncpa [#allocation4], 1

</llo_original>
